<compile_context>
chip_gen: v7x
topology: tpu7x:2x2x1
jax: 0.10.0
libtpu: 0.0.40
codegen_flags: <defaults>
</compile_context>

<pallas_src>
import jax
import jax.numpy as jnp
from jax.experimental import pallas as pl
from jax.experimental.pallas import tpu as pltpu

LANES = 128                 # vreg lane width
MAX_TILE_ROWS = 8192        # (8192, 128) f32 tile = 4 MiB per buffer
VMEM_LIMIT_BYTES = 32 * 1024 * 1024   # 2 in-bufs + 2 out-bufs = 16 MiB + headroom
SMALL_N_FASTPATH = 32768    # below this many elements, plain jnp wins


def _round_up(a: int, b: int) -> int:
    return ((a + b - 1) // b) * b


def _linear_kernel(w_ref, b_ref, x_ref, o_ref):
    # y = w * x + b  (scalar FMA on the VPU, f32 accumulation).
    w = w_ref[0]
    b = b_ref[0]
    y = x_ref[...].astype(jnp.float32) * w + b
    o_ref[...] = y.astype(o_ref.dtype)


def regression_forward(x, weight, bias, *, force_pallas=False):
    """Pallas equivalent of nn.Linear(1, 1): x (N, 1) -> (N, 1)."""
    n, in_features = x.shape
    assert in_features == 1
    out_dtype = x.dtype
    total = n * in_features

    # f32 scalar parameters, shared by the kernel, the tail and the fast path
    # so results are bit-consistent across the split.
    w1 = weight.reshape(-1).astype(jnp.float32)   # (1,)
    b1 = bias.reshape(-1).astype(jnp.float32)     # (1,)

    rows = total // LANES          # full 128-lane rows covered by the kernel
    n_main = rows * LANES

    # Fast path: tiny batches (or batches too small to fill even one lane
    # row) are a single fused XLA multiply-add — no custom-call overhead.
    if rows == 0 or (not force_pallas and total < SMALL_N_FASTPATH):
        y = x.astype(jnp.float32) * w1[0] + b1[0]
        return y.astype(out_dtype)

    x_flat = x.reshape(-1)                               # bitcast of (N, 1)
    # When N % 128 == 0 this is a pure bitcast view; otherwise only the
    # main prefix is staged (no full-size pad buffer is ever written).
    x2d = x_flat[:n_main].reshape(rows, LANES)

    tile_rows = min(MAX_TILE_ROWS, _round_up(rows, 8))
    grid = (pl.cdiv(rows, tile_rows),)

    out2d = pl.pallas_call(
        _linear_kernel,
        out_shape=jax.ShapeDtypeStruct((rows, LANES), out_dtype),
        grid=grid,
        in_specs=[
            pl.BlockSpec(memory_space=pltpu.SMEM),               # weight (1,)
            pl.BlockSpec(memory_space=pltpu.SMEM),               # bias   (1,)
            pl.BlockSpec((tile_rows, LANES), lambda i: (i, 0)),  # x tile
        ],
        out_specs=pl.BlockSpec((tile_rows, LANES), lambda i: (i, 0)),
        compiler_params=pltpu.CompilerParams(
            dimension_semantics=("parallel",),
            vmem_limit_bytes=VMEM_LIMIT_BYTES,
        ),
    )(w1, b1, x2d)

    y_main = out2d.reshape(n_main, in_features)          # copy-free reshape

    if n_main == total:
        return y_main

    # <=127-element tail, same f32 math as the kernel.
    y_tail = (x_flat[n_main:].astype(jnp.float32) * w1[0] + b1[0])
    y_tail = y_tail.astype(out_dtype).reshape(-1, in_features)
    return jnp.concatenate([y_main, y_tail], axis=0)


if __name__ == "__main__":
    key = jax.random.PRNGKey(0)
    kx1, kx2, kx3, kw, kb = jax.random.split(key, 5)

    # Deterministic parameters (shapes from nn.Linear(1, 1)).
    weight = jax.random.normal(kw, (1, 1), dtype=jnp.float32)   # (out, in)
    bias = jax.random.normal(kb, (1,), dtype=jnp.float32)

    def ref(xv):
        return xv @ weight.T + bias

    # 1) Tiny batch (matches the tutorial usage): small-N fast path.
    x1 = jax.random.normal(kx1, (8, 1), dtype=jnp.float32)
    y1 = regression_forward(x1, weight, bias)
    jax.block_until_ready(y1)
    assert y1.shape == (8, 1)
    assert jnp.allclose(y1, ref(x1), atol=1e-6)

    # 2) Small ragged batch forced through the Pallas kernel: exercises the
    #    masked boundary block (rows=2 inside an (8,128) block) + jnp tail.
    x2 = jax.random.normal(kx2, (300, 1), dtype=jnp.float32)
    y2 = regression_forward(x2, weight, bias, force_pallas=True)
    jax.block_until_ready(y2)
    assert y2.shape == (300, 1)
    assert jnp.allclose(y2, ref(x2), atol=1e-6)

    # 3) 128-multiple batch: fully copy-free bitcast path, kernel only.
    x3 = jax.random.normal(kx3, (1024, 1), dtype=jnp.float32)
    y3 = regression_forward(x3, weight, bias, force_pallas=True)
    jax.block_until_ready(y3)
    assert y3.shape == (1024, 1)
    assert jnp.allclose(y3, ref(x3), atol=1e-6)

    print("KERNEL_OK")
</pallas_src>

<mosaic_0001>
module attributes {stable_mosaic.version = 11 : i64} {
  func.func @_linear_kernel(%arg0: i32, %arg1: memref<1xf32, #tpu.memory_space<smem>>, %arg2: memref<1xf32, #tpu.memory_space<smem>>, %arg3: memref<8x128xf32, #tpu.memory_space<vmem>>, %arg4: memref<8x128xf32, #tpu.memory_space<vmem>>) attributes {dimension_semantics = [#tpu.dimension_semantics<parallel>], iteration_bounds = array<i64: 1>, scalar_prefetch = 0 : i64, scratch_operands = 0 : i64, tpu.core_type = #tpu.core_type<tc>, window_params = [{transform_indices = @transform_0, window_bounds = array<i64: 1>}, {transform_indices = @transform_1, window_bounds = array<i64: 1>}, {transform_indices = @transform_2, window_bounds = array<i64: 8, 128>}, {transform_indices = @transform_3, window_bounds = array<i64: 8, 128>}]} {
    %c0 = arith.constant 0 : index
    %0 = memref.load %arg1[%c0] : memref<1xf32, #tpu.memory_space<smem>>
    %c0_0 = arith.constant 0 : index
    %1 = memref.load %arg2[%c0_0] : memref<1xf32, #tpu.memory_space<smem>>
    %c0_1 = arith.constant 0 : index
    %c0_2 = arith.constant 0 : index
    %2 = vector.load %arg3[%c0_1, %c0_2] : memref<8x128xf32, #tpu.memory_space<vmem>>, vector<8x128xf32>
    %3 = vector.broadcast %0 : f32 to vector<8x128xf32>
    %4 = arith.mulf %2, %3 : vector<8x128xf32>
    %5 = vector.broadcast %1 : f32 to vector<8x128xf32>
    %6 = arith.addf %4, %5 : vector<8x128xf32>
    %c0_3 = arith.constant 0 : index
    %c0_4 = arith.constant 0 : index
    %7 = vector.load %arg4[%c0_3, %c0_4] : memref<8x128xf32, #tpu.memory_space<vmem>>, vector<8x128xf32>
    tpu.vector_store %arg4[%c0_3, %c0_4], %6 {strides = array<i32>} : memref<8x128xf32, #tpu.memory_space<vmem>>, vector<8x128xf32>,
    return
  }
  func.func @transform_0(%arg0: i32) -> i32 {
    %c0_i32 = arith.constant 0 : i32
    %c0_i32_0 = arith.constant 0 : i32
    return %c0_i32 : i32
  }
  func.func @transform_1(%arg0: i32) -> i32 {
    %c0_i32 = arith.constant 0 : i32
    %c0_i32_0 = arith.constant 0 : i32
    return %c0_i32 : i32
  }
  func.func @transform_2(%arg0: i32) -> (i32, i32) {
    %c0_i32 = arith.constant 0 : i32
    %c0_i32_0 = arith.constant 0 : i32
    return %arg0, %c0_i32 : i32, i32
  }
  func.func @transform_3(%arg0: i32) -> (i32, i32) {
    %c0_i32 = arith.constant 0 : i32
    %c0_i32_0 = arith.constant 0 : i32
    return %arg0, %c0_i32 : i32, i32
  }
}

</mosaic_0001>

<llo_original>
// kernel: tpu_custom_call.1
$region0: #{tpu_custom_call.1}
  #allocation0 [shape = 'u32[]', space=smem, size = 0x4, offset = 0x4, fixed_abs, tag = 'smem constant byte address 0x4 - core index']
  #allocation1 [shape = 'u32[144,128]{1,0:T(1,128)}', space=vmem, size = 0x12000, scoped, tag = 'internal scratch']
  #allocation2 [shape = 'f32[1]{0:T(128)S(6)}', space=smem, size = 0x200, scoped, tag = 'scoped memory for tpu_custom_call.1']
  #allocation3 [shape = 'f32[1]{0:T(128)S(6)}', space=smem, size = 0x200, scoped, tag = 'scoped memory for tpu_custom_call.1']
  %s0 = inlined_call_operand.<no memory space> [shape: f32[1], index: 0, kind: input, shape index: {}]
  %s1 = inlined_call_operand.<no memory space> [shape: f32[1], index: 1, kind: input, shape index: {}]
  %s2 = inlined_call_operand.vmem [shape: f32[2,128], index: 2, kind: input, shape index: {}]
  %s3 = inlined_call_operand.hbm [shape: f32[2,128], index: 3, kind: output, shape index: {}]
  %s4 = sld [smem:[#allocation0]]
  $region22: #{tpu_custom_call.1} parent=0
    _
  %s6 = ssub.s32 1, %s4
  %s7 = scalar_select 0, %s6, %s4
  %8 = sst [smem:[#allocation2]] %s0
  %9 = sst [smem:[#allocation3]] %s1
  $region1: #{tpu_custom_call.1} parent=0
    #allocation4 [shape = 'u8[4096]{0}', space=vmem, size = 0x1000, scoped, tag = 'output window, operand 0, single buffered']
    #allocation5 [shape = 's32[1]{0}', space=sflag, size = 0x4, scoped, tag = 'scoped memory for tpu_custom_call.1']
    %10 = vsyncpa [#allocation5], 0
    // Predicated region
    $region2: #{tpu_custom_call.1} parent=1 // pred_check
      _
    $region3: #{tpu_custom_call.1} parent=1 // pred_check_branch
      %12 = sbr.rel (0) target = $region5
    $region4: #{tpu_custom_call.1} parent=1 // pred_region
      _
    $region5: #{tpu_custom_call.1} parent=1 // pred_fallthru
      _
    // Predicated region
    $region6: #{tpu_custom_call.1} parent=1 // pred_check
      _
    $region7: #{tpu_custom_call.1} parent=1 // pred_check_branch
      %14 = sbr.rel (0) target = $region9
    $region8: #{tpu_custom_call.1} parent=1 // pred_region
      _
    $region9: #{tpu_custom_call.1} parent=1 // pred_fallthru
      _
    // Predicated region
    $region10: #{tpu_custom_call.1} parent=1 // pred_check
      _
    $region11: #{tpu_custom_call.1} parent=1 // pred_check_branch
      %16 = sbr.rel (0) target = $region13
    $region12: #{tpu_custom_call.1} parent=1 // pred_region
      _
    $region13: #{tpu_custom_call.1} parent=1 // pred_fallthru
      _
    %s17 = sld [smem:[#allocation2]]
    %s18 = sld [smem:[#allocation3]]
    %v19 = vld [vmem:[%s2] sm:$0xff]
    %v20 = vstv %s17
    %v21 = vmul.f32 %v19, %v20
    %v22 = vstv %s18
    %v23 = vadd.f32 %v21, %v22
    %24 = vst [vmem:[#allocation4] sm:$0xff] %v23
    // Predicated region
    $region14: #{tpu_custom_call.1} parent=1 // pred_check
      _
    $region15: #{tpu_custom_call.1} parent=1 // pred_check_branch
      %26 = sbr.rel (0) target = $region17
    $region16: #{tpu_custom_call.1} parent=1 // pred_region
      %s28 = ssub.s32 128, 32
      %29 = vsyncadd [#allocation5], %s28
      %s30 = sshll.u32 [#allocation4], 4
      %s31 = int_to_ptr.vmem [resolvable:$true] %s30
      %36 = dma.vmem_to_hbm [thread:$0]  %s31, 32, %s3, [#allocation5], 32, 32, 2
    $region17: #{tpu_custom_call.1} parent=1 // pred_fallthru
      _
    // Predicated region
    $region18: #{tpu_custom_call.1} parent=1 // pred_check
      _
    $region19: #{tpu_custom_call.1} parent=1 // pred_check_branch
      %38 = sbr.rel (0) target = $region21
    $region20: #{tpu_custom_call.1} parent=1 // pred_region
      %39 = dma.done [#allocation5], 128
    $region21: #{tpu_custom_call.1} parent=1 // pred_fallthru
      _
    %40 = vsyncpa [#allocation5], 1

</llo_original>
